<compile_context>
chip_gen: v5e
topology: v5e:2x2
jax: 0.10.0
libtpu: 0.0.40
codegen_flags: <defaults>
</compile_context>

<pallas_src>
import functools

import jax
import jax.numpy as jnp
from jax.experimental import pallas as pl
from jax.experimental.pallas import tpu as pltpu

LN_EPS = 1e-5  # PyTorch nn.LayerNorm default


def _layernorm(h, gamma, beta):
    # Independent reductions (E[x], E[x^2]) -> shorter dependent VPU chain.
    mu = jnp.mean(h, axis=-1, keepdims=True)
    ms = jnp.mean(h * h, axis=-1, keepdims=True)
    var = jnp.maximum(ms - mu * mu, 0.0)
    return (h - mu) * jax.lax.rsqrt(var + LN_EPS) * gamma + beta


def generator_kernel(x_ref,
                     w1_ref, b1_ref, g1_ref, be1_ref,
                     w2_ref, b2_ref, g2_ref, be2_ref,
                     w3_ref, b3_ref,
                     o_ref, *, use_bf16):
    mm_dtype = jnp.bfloat16 if use_bf16 else jnp.float32

    x = x_ref[...].astype(mm_dtype)

    # fc_1 -> ln_1 -> relu   (f32 accumulation on the MXU, f32 LayerNorm)
    h = jnp.dot(x, w1_ref[...], preferred_element_type=jnp.float32) + b1_ref[...]
    h = _layernorm(h, g1_ref[...], be1_ref[...])
    h = jnp.maximum(h, 0.0)

    # fc_2 -> ln_2 -> relu
    h = jnp.dot(h.astype(mm_dtype), w2_ref[...],
                preferred_element_type=jnp.float32) + b2_ref[...]
    h = _layernorm(h, g2_ref[...], be2_ref[...])
    h = jnp.maximum(h, 0.0)

    # fc_3 -> sigmoid, produced lane-dense.  w3_ref is (8, d4) with the real
    # weight row at index 0 (rows 1..7 zero).  Contracting the last dim of
    # both operands gives (8, tile_m): the per-row logits land on lanes, so
    # the output store is a wide unmasked vst.
    logits8 = jax.lax.dot_general(
        w3_ref[...], h.astype(mm_dtype),
        dimension_numbers=(((1,), (1,)), ((), ())),
        preferred_element_type=jnp.float32)
    logit = logits8[0:1, :] + b3_ref[...]            # (1, tile_m)

    ex = jnp.exp(-logit)                              # EUP
    if use_bf16:
        sig = pl.reciprocal(1.0 + ex, approx=True)    # EUP slot, ~free
    else:
        sig = 1.0 / (1.0 + ex)                        # exact path
    o_ref[...] = sig.reshape(o_ref.shape).astype(o_ref.dtype)


def _round_up(n, m):
    return ((n + m - 1) // m) * m


def _pick_tile_m(rows, d_model, requested, x_itemsize):
    """Choose a row-tile size: large, multiple of 128, VMEM-safe on v7x."""
    if requested is not None:
        tm = int(requested)
    else:
        d2, d4 = max(d_model // 2, 1), max(d_model // 4, 1)
        # Rough per-row VMEM footprint: double-buffered x tile + bf16 cast of
        # the tile + the two hidden activations (f32 + bf16 copies).
        per_row = (2 * d_model * x_itemsize
                   + 2 * d_model
                   + 8 * d2 + 8 * d4)
        budget = 20 * 2**20            # keep well under v7x's 64 MiB VMEM
        tm = budget // max(per_row, 1)
        tm = max(256, min(2048, tm))
    tm = max(128, (tm // 128) * 128)   # rows map to lanes in the output slab
    # Do not tile far past the actual row count.
    tm = min(tm, _round_up(rows, 128))
    # Keep >= 2 grid steps when there is enough work so both v7x TensorCores
    # get a share of the "parallel" grid axis.
    if rows > 256:
        tm = min(tm, _round_up(-(-rows // 2), 128))
    return max(tm, 128)


def _vmem_limit_bytes(tile_m, d_model, d2, d4, x_itemsize, w_itemsize):
    x_tiles = 2 * tile_m * d_model * x_itemsize                 # double-buffered input
    out_tiles = 2 * tile_m * 4                                  # double-buffered output
    weights = 2 * ((d_model * d2 + d2 * d4 + 8 * d4) * w_itemsize
                   + (3 * d2 + 3 * d4 + 1) * 4)
    interm = tile_m * (2 * d_model + 8 * d2 + 8 * d4)           # casts + activations
    est = x_tiles + out_tiles + weights + interm
    # Generous headroom, explicitly above the 16 MiB v5e scoped default,
    # capped below v7x's 64 MiB physical VMEM.
    return int(min(60 * 2**20, max(24 * 2**20, 2 * est)))


def generator_forward(x, params, *, tile_m=None, use_bf16=True):
    """x: (..., d_model) float -> (..., 1) float32."""
    (w1, b1, g1, be1, w2, b2, g2, be2, w3, b3) = params
    d_model = x.shape[-1]
    d2 = w1.shape[1]   # d_model // 2
    d4 = w2.shape[1]   # d_model // 4
    lead = x.shape[:-1]
    rows = 1
    for s in lead:
        rows *= s

    x2 = x.reshape(rows, d_model)
    tm = _pick_tile_m(rows, d_model, tile_m, x2.dtype.itemsize)
    num_tiles = pl.cdiv(rows, tm)
    padded_rows = num_tiles * tm
    if padded_rows != rows:
        x2 = jnp.pad(x2, ((0, padded_rows - rows), (0, 0)))

    mm_dtype = jnp.bfloat16 if use_bf16 else jnp.float32
    w1c = w1.astype(mm_dtype)
    w2c = w2.astype(mm_dtype)
    # fc_3 weight: (d4, 1) column -> an (8, d4) row block (row 0 real, rest 0)
    # so the final contraction is a well-shaped "q @ k^T"-style dot_general.
    w3p = jnp.zeros((8, d4), mm_dtype).at[0, :].set(w3.reshape(d4).astype(mm_dtype))

    full = lambda arr: pl.BlockSpec(arr.shape, lambda i: (0,) * arr.ndim)

    vmem_limit = _vmem_limit_bytes(
        tm, d_model, d2, d4, x2.dtype.itemsize, jnp.dtype(mm_dtype).itemsize)

    out = pl.pallas_call(
        functools.partial(generator_kernel, use_bf16=use_bf16),
        out_shape=jax.ShapeDtypeStruct((num_tiles, 1, tm), jnp.float32),
        grid_spec=pltpu.PrefetchScalarGridSpec(
            num_scalar_prefetch=0,
            grid=(num_tiles,),
            in_specs=[
                pl.BlockSpec((tm, d_model), lambda i: (i, 0)),   # x row tile
                full(w1c), full(b1), full(g1), full(be1),
                full(w2c), full(b2), full(g2), full(be2),
                full(w3p), full(b3),
            ],
            out_specs=pl.BlockSpec((1, 1, tm), lambda i: (i, 0, 0)),
        ),
        compiler_params=pltpu.CompilerParams(
            dimension_semantics=("parallel",),
            vmem_limit_bytes=vmem_limit),
    )(x2, w1c, b1, g1, be1, w2c, b2, g2, be2, w3p, b3)

    out = out.reshape(padded_rows)[:rows]
    return out.reshape(*lead, 1)


def make_params(key, d_model):
    """Deterministic synthetic parameters (shapes match the PyTorch module)."""
    d2, d4 = d_model // 2, d_model // 4
    ks = jax.random.split(key, 6)
    scale = lambda fan_in: 1.0 / jnp.sqrt(jnp.float32(fan_in))
    # Linear weights stored already transposed: (in_features, out_features)
    w1 = jax.random.normal(ks[0], (d_model, d2), jnp.float32) * scale(d_model)
    b1 = jax.random.normal(ks[1], (1, d2), jnp.float32) * 0.1
    w2 = jax.random.normal(ks[2], (d2, d4), jnp.float32) * scale(d2)
    b2 = jax.random.normal(ks[3], (1, d4), jnp.float32) * 0.1
    w3 = jax.random.normal(ks[4], (d4, 1), jnp.float32) * scale(d4)
    b3 = jax.random.normal(ks[5], (1, 1), jnp.float32) * 0.1
    # LayerNorm affine params (PyTorch default init: ones / zeros)
    g1 = jnp.ones((1, d2), jnp.float32)
    be1 = jnp.zeros((1, d2), jnp.float32)
    g2 = jnp.ones((1, d4), jnp.float32)
    be2 = jnp.zeros((1, d4), jnp.float32)
    return (w1, b1, g1, be1, w2, b2, g2, be2, w3, b3)


def reference_forward(x, params, mm_dtype=jnp.float32):
    (w1, b1, g1, be1, w2, b2, g2, be2, w3, b3) = params

    def mm(a, b):
        return jnp.dot(a.astype(mm_dtype), b.astype(mm_dtype),
                       preferred_element_type=jnp.float32)

    h = mm(x, w1) + b1
    h = _layernorm(h, g1, be1)
    h = jax.nn.relu(h)
    h = mm(h, w2) + b2
    h = _layernorm(h, g2, be2)
    h = jax.nn.relu(h)
    h = mm(h, w3) + b3
    return jax.nn.sigmoid(h)


if __name__ == "__main__":
    d_model = 32
    batch, seq = 2, 8

    key = jax.random.PRNGKey(0)
    kx, kp = jax.random.split(key)
    x = jax.random.normal(kx, (batch, seq, d_model), jnp.float32)
    params = make_params(kp, d_model)

    ref_f32 = reference_forward(x, params)

    # Exact path (f32 MXU operands) -- tight tolerance against f32 reference.
    out_f32 = jax.block_until_ready(generator_forward(x, params, use_bf16=False))
    assert out_f32.shape == (batch, seq, 1), out_f32.shape
    assert jnp.allclose(out_f32, ref_f32, atol=1e-5, rtol=1e-5), \
        float(jnp.max(jnp.abs(out_f32 - ref_f32)))

    # Fast path (bf16 MXU operands, f32 accumulation) -- compared against a
    # reference that rounds the matmul operands to bf16 the same way.
    ref_bf16 = reference_forward(x, params, mm_dtype=jnp.bfloat16)
    out_bf16 = jax.block_until_ready(generator_forward(x, params, use_bf16=True))
    assert out_bf16.shape == (batch, seq, 1), out_bf16.shape
    assert jnp.allclose(out_bf16, ref_bf16, atol=5e-3, rtol=0.0), \
        float(jnp.max(jnp.abs(out_bf16 - ref_bf16)))

    print("KERNEL_OK")
</pallas_src>

<mosaic_0001>
module attributes {stable_mosaic.version = 11 : i64} {
  func.func @generator_kernel(%arg0: i32, %arg1: memref<128x32xf32, #tpu.memory_space<vmem>>, %arg2: memref<32x16xf32, #tpu.memory_space<vmem>>, %arg3: memref<1x16xf32, #tpu.memory_space<vmem>>, %arg4: memref<1x16xf32, #tpu.memory_space<vmem>>, %arg5: memref<1x16xf32, #tpu.memory_space<vmem>>, %arg6: memref<16x8xf32, #tpu.memory_space<vmem>>, %arg7: memref<1x8xf32, #tpu.memory_space<vmem>>, %arg8: memref<1x8xf32, #tpu.memory_space<vmem>>, %arg9: memref<1x8xf32, #tpu.memory_space<vmem>>, %arg10: memref<8x8xf32, #tpu.memory_space<vmem>>, %arg11: memref<1x1xf32, #tpu.memory_space<vmem>>, %arg12: memref<1x1x128xf32, #tpu.memory_space<vmem>>) attributes {dimension_semantics = [#tpu.dimension_semantics<parallel>], iteration_bounds = array<i64: 1>, scalar_prefetch = 0 : i64, scratch_operands = 0 : i64, tpu.core_type = #tpu.core_type<tc>, window_params = [{transform_indices = @transform_0, window_bounds = array<i64: 128, 32>}, {pipeline_mode = #tpu.pipeline_mode<synchronous>, transform_indices = @transform_1, window_bounds = array<i64: 32, 16>}, {pipeline_mode = #tpu.pipeline_mode<synchronous>, transform_indices = @transform_2, window_bounds = array<i64: 1, 16>}, {pipeline_mode = #tpu.pipeline_mode<synchronous>, transform_indices = @transform_3, window_bounds = array<i64: 1, 16>}, {pipeline_mode = #tpu.pipeline_mode<synchronous>, transform_indices = @transform_4, window_bounds = array<i64: 1, 16>}, {pipeline_mode = #tpu.pipeline_mode<synchronous>, transform_indices = @transform_5, window_bounds = array<i64: 16, 8>}, {pipeline_mode = #tpu.pipeline_mode<synchronous>, transform_indices = @transform_6, window_bounds = array<i64: 1, 8>}, {pipeline_mode = #tpu.pipeline_mode<synchronous>, transform_indices = @transform_7, window_bounds = array<i64: 1, 8>}, {pipeline_mode = #tpu.pipeline_mode<synchronous>, transform_indices = @transform_8, window_bounds = array<i64: 1, 8>}, {pipeline_mode = #tpu.pipeline_mode<synchronous>, transform_indices = @transform_9, window_bounds = array<i64: 8, 8>}, {pipeline_mode = #tpu.pipeline_mode<synchronous>, transform_indices = @transform_10, window_bounds = array<i64: 1, 1>}, {transform_indices = @transform_11, window_bounds = array<i64: 1, 1, 128>}]} {
    %c0 = arith.constant 0 : index
    %c0_0 = arith.constant 0 : index
    %0 = vector.load %arg1[%c0, %c0_0] : memref<128x32xf32, #tpu.memory_space<vmem>>, vector<128x32xf32>
    %c0_1 = arith.constant 0 : index
    %c0_2 = arith.constant 0 : index
    %1 = vector.load %arg2[%c0_1, %c0_2] : memref<32x16xf32, #tpu.memory_space<vmem>>, vector<32x16xf32>
    %cst = arith.constant dense<0.000000e+00> : vector<128x16xf32>
    %2 = tpu.matmul %0, %1, %cst {dimension_numbers = #tpu.dot_dimension_numbers<[1], [0], [0], [1], [0, 0, 1, 1], [], []>} : vector<128x32xf32>, vector<32x16xf32>, vector<128x16xf32> -> vector<128x16xf32>
    %c0_3 = arith.constant 0 : index
    %c0_4 = arith.constant 0 : index
    %3 = vector.load %arg3[%c0_3, %c0_4] : memref<1x16xf32, #tpu.memory_space<vmem>>, vector<1x16xf32>
    %4 = vector.broadcast %3 : vector<1x16xf32> to vector<128x16xf32>
    %5 = arith.addf %2, %4 : vector<128x16xf32>
    %c0_5 = arith.constant 0 : index
    %c0_6 = arith.constant 0 : index
    %6 = vector.load %arg4[%c0_5, %c0_6] : memref<1x16xf32, #tpu.memory_space<vmem>>, vector<1x16xf32>
    %c0_7 = arith.constant 0 : index
    %c0_8 = arith.constant 0 : index
    %7 = vector.load %arg5[%c0_7, %c0_8] : memref<1x16xf32, #tpu.memory_space<vmem>>, vector<1x16xf32>
    %cst_9 = arith.constant dense<0.000000e+00> : vector<128xf32>
    %8 = vector.multi_reduction <add>, %5, %cst_9 [1] : vector<128x16xf32> to vector<128xf32>
    %9 = vector.shape_cast %8 : vector<128xf32> to vector<128x1xf32>
    %cst_10 = arith.constant 1.600000e+01 : f32
    %10 = vector.broadcast %cst_10 : f32 to vector<128x1xf32>
    %11 = arith.divf %9, %10 : vector<128x1xf32>
    %12 = arith.mulf %5, %5 : vector<128x16xf32>
    %cst_11 = arith.constant dense<0.000000e+00> : vector<128xf32>
    %13 = vector.multi_reduction <add>, %12, %cst_11 [1] : vector<128x16xf32> to vector<128xf32>
    %14 = vector.shape_cast %13 : vector<128xf32> to vector<128x1xf32>
    %cst_12 = arith.constant 1.600000e+01 : f32
    %15 = vector.broadcast %cst_12 : f32 to vector<128x1xf32>
    %16 = arith.divf %14, %15 : vector<128x1xf32>
    %17 = arith.mulf %11, %11 : vector<128x1xf32>
    %18 = arith.subf %16, %17 : vector<128x1xf32>
    %cst_13 = arith.constant 0.000000e+00 : f32
    %19 = vector.broadcast %cst_13 : f32 to vector<128x1xf32>
    %20 = arith.maximumf %18, %19 : vector<128x1xf32>
    %21 = vector.broadcast %11 : vector<128x1xf32> to vector<128x16xf32>
    %22 = arith.subf %5, %21 : vector<128x16xf32>
    %cst_14 = arith.constant 9.99999974E-6 : f32
    %23 = vector.broadcast %cst_14 : f32 to vector<128x1xf32>
    %24 = arith.addf %20, %23 : vector<128x1xf32>
    %25 = math.rsqrt %24 : vector<128x1xf32>
    %26 = vector.broadcast %25 : vector<128x1xf32> to vector<128x16xf32>
    %27 = arith.mulf %22, %26 : vector<128x16xf32>
    %28 = vector.broadcast %6 : vector<1x16xf32> to vector<128x16xf32>
    %29 = arith.mulf %27, %28 : vector<128x16xf32>
    %30 = vector.broadcast %7 : vector<1x16xf32> to vector<128x16xf32>
    %31 = arith.addf %29, %30 : vector<128x16xf32>
    %cst_15 = arith.constant 0.000000e+00 : f32
    %32 = vector.broadcast %cst_15 : f32 to vector<128x16xf32>
    %33 = arith.maximumf %31, %32 : vector<128x16xf32>
    %c0_16 = arith.constant 0 : index
    %c0_17 = arith.constant 0 : index
    %34 = vector.load %arg6[%c0_16, %c0_17] : memref<16x8xf32, #tpu.memory_space<vmem>>, vector<16x8xf32>
    %cst_18 = arith.constant dense<0.000000e+00> : vector<128x8xf32>
    %35 = tpu.matmul %33, %34, %cst_18 {dimension_numbers = #tpu.dot_dimension_numbers<[1], [0], [0], [1], [0, 0, 1, 1], [], []>} : vector<128x16xf32>, vector<16x8xf32>, vector<128x8xf32> -> vector<128x8xf32>
    %c0_19 = arith.constant 0 : index
    %c0_20 = arith.constant 0 : index
    %36 = vector.load %arg7[%c0_19, %c0_20] : memref<1x8xf32, #tpu.memory_space<vmem>>, vector<1x8xf32>
    %37 = vector.broadcast %36 : vector<1x8xf32> to vector<128x8xf32>
    %38 = arith.addf %35, %37 : vector<128x8xf32>
    %c0_21 = arith.constant 0 : index
    %c0_22 = arith.constant 0 : index
    %39 = vector.load %arg8[%c0_21, %c0_22] : memref<1x8xf32, #tpu.memory_space<vmem>>, vector<1x8xf32>
    %c0_23 = arith.constant 0 : index
    %c0_24 = arith.constant 0 : index
    %40 = vector.load %arg9[%c0_23, %c0_24] : memref<1x8xf32, #tpu.memory_space<vmem>>, vector<1x8xf32>
    %cst_25 = arith.constant dense<0.000000e+00> : vector<128xf32>
    %41 = vector.multi_reduction <add>, %38, %cst_25 [1] : vector<128x8xf32> to vector<128xf32>
    %42 = vector.shape_cast %41 : vector<128xf32> to vector<128x1xf32>
    %cst_26 = arith.constant 8.000000e+00 : f32
    %43 = vector.broadcast %cst_26 : f32 to vector<128x1xf32>
    %44 = arith.divf %42, %43 : vector<128x1xf32>
    %45 = arith.mulf %38, %38 : vector<128x8xf32>
    %cst_27 = arith.constant dense<0.000000e+00> : vector<128xf32>
    %46 = vector.multi_reduction <add>, %45, %cst_27 [1] : vector<128x8xf32> to vector<128xf32>
    %47 = vector.shape_cast %46 : vector<128xf32> to vector<128x1xf32>
    %cst_28 = arith.constant 8.000000e+00 : f32
    %48 = vector.broadcast %cst_28 : f32 to vector<128x1xf32>
    %49 = arith.divf %47, %48 : vector<128x1xf32>
    %50 = arith.mulf %44, %44 : vector<128x1xf32>
    %51 = arith.subf %49, %50 : vector<128x1xf32>
    %cst_29 = arith.constant 0.000000e+00 : f32
    %52 = vector.broadcast %cst_29 : f32 to vector<128x1xf32>
    %53 = arith.maximumf %51, %52 : vector<128x1xf32>
    %54 = vector.broadcast %44 : vector<128x1xf32> to vector<128x8xf32>
    %55 = arith.subf %38, %54 : vector<128x8xf32>
    %cst_30 = arith.constant 9.99999974E-6 : f32
    %56 = vector.broadcast %cst_30 : f32 to vector<128x1xf32>
    %57 = arith.addf %53, %56 : vector<128x1xf32>
    %58 = math.rsqrt %57 : vector<128x1xf32>
    %59 = vector.broadcast %58 : vector<128x1xf32> to vector<128x8xf32>
    %60 = arith.mulf %55, %59 : vector<128x8xf32>
    %61 = vector.broadcast %39 : vector<1x8xf32> to vector<128x8xf32>
    %62 = arith.mulf %60, %61 : vector<128x8xf32>
    %63 = vector.broadcast %40 : vector<1x8xf32> to vector<128x8xf32>
    %64 = arith.addf %62, %63 : vector<128x8xf32>
    %cst_31 = arith.constant 0.000000e+00 : f32
    %65 = vector.broadcast %cst_31 : f32 to vector<128x8xf32>
    %66 = arith.maximumf %64, %65 : vector<128x8xf32>
    %c0_32 = arith.constant 0 : index
    %c0_33 = arith.constant 0 : index
    %67 = vector.load %arg10[%c0_32, %c0_33] : memref<8x8xf32, #tpu.memory_space<vmem>>, vector<8x8xf32>
    %cst_34 = arith.constant dense<0.000000e+00> : vector<8x128xf32>
    %68 = tpu.matmul %67, %66, %cst_34 {dimension_numbers = #tpu.dot_dimension_numbers<[1], [1], [0], [0], [0, 0, 1, 0], [], []>} : vector<8x8xf32>, vector<128x8xf32>, vector<8x128xf32> -> vector<8x128xf32>
    %69 = vector.extract_strided_slice %68 {offsets = [0, 0], sizes = [1, 128], strides = [1, 1]} : vector<8x128xf32> to vector<1x128xf32>
    %c0_35 = arith.constant 0 : index
    %c0_36 = arith.constant 0 : index
    %70 = vector.load %arg11[%c0_35, %c0_36] : memref<1x1xf32, #tpu.memory_space<vmem>>, vector<1x1xf32>
    %71 = vector.broadcast %70 : vector<1x1xf32> to vector<1x128xf32>
    %72 = arith.addf %69, %71 : vector<1x128xf32>
    %cst_37 = arith.constant 0.000000e+00 : f32
    %73 = vector.broadcast %cst_37 : f32 to vector<1x128xf32>
    %74 = arith.subf %73, %72 : vector<1x128xf32>
    %75 = math.exp %74 : vector<1x128xf32>
    %cst_38 = arith.constant 1.000000e+00 : f32
    %76 = vector.broadcast %cst_38 : f32 to vector<1x128xf32>
    %77 = arith.addf %76, %75 : vector<1x128xf32>
    %cst_39 = arith.constant 1.000000e+00 : f32
    %78 = vector.broadcast %cst_39 : f32 to vector<1x128xf32>
    %79 = arith.divf %78, %77 : vector<1x128xf32>
    %80 = vector.shape_cast %79 : vector<1x128xf32> to vector<1x1x128xf32>
    %c0_40 = arith.constant 0 : index
    %c0_41 = arith.constant 0 : index
    %c0_42 = arith.constant 0 : index
    %81 = vector.load %arg12[%c0_40, %c0_41, %c0_42] : memref<1x1x128xf32, #tpu.memory_space<vmem>>, vector<1x1x128xf32>
    tpu.vector_store %arg12[%c0_40, %c0_41, %c0_42], %80 {strides = array<i32>} : memref<1x1x128xf32, #tpu.memory_space<vmem>>, vector<1x1x128xf32>,
    return
  }
  func.func @transform_0(%arg0: i32) -> (i32, i32) {
    %c0_i32 = arith.constant 0 : i32
    %c0_i32_0 = arith.constant 0 : i32
    return %arg0, %c0_i32 : i32, i32
  }
  func.func @transform_1(%arg0: i32) -> (i32, i32) {
    %c0_i32 = arith.constant 0 : i32
    %c0_i32_0 = arith.constant 0 : i32
    %c0_i32_1 = arith.constant 0 : i32
    return %c0_i32, %c0_i32_0 : i32, i32
  }
  func.func @transform_2(%arg0: i32) -> (i32, i32) {
    %c0_i32 = arith.constant 0 : i32
    %c0_i32_0 = arith.constant 0 : i32
    %c0_i32_1 = arith.constant 0 : i32
    return %c0_i32, %c0_i32_0 : i32, i32
  }
  func.func @transform_3(%arg0: i32) -> (i32, i32) {
    %c0_i32 = arith.constant 0 : i32
    %c0_i32_0 = arith.constant 0 : i32
    %c0_i32_1 = arith.constant 0 : i32
    return %c0_i32, %c0_i32_0 : i32, i32
  }
  func.func @transform_4(%arg0: i32) -> (i32, i32) {
    %c0_i32 = arith.constant 0 : i32
    %c0_i32_0 = arith.constant 0 : i32
    %c0_i32_1 = arith.constant 0 : i32
    return %c0_i32, %c0_i32_0 : i32, i32
  }
  func.func @transform_5(%arg0: i32) -> (i32, i32) {
    %c0_i32 = arith.constant 0 : i32
    %c0_i32_0 = arith.constant 0 : i32
    %c0_i32_1 = arith.constant 0 : i32
    return %c0_i32, %c0_i32_0 : i32, i32
  }
  func.func @transform_6(%arg0: i32) -> (i32, i32) {
    %c0_i32 = arith.constant 0 : i32
    %c0_i32_0 = arith.constant 0 : i32
    %c0_i32_1 = arith.constant 0 : i32
    return %c0_i32, %c0_i32_0 : i32, i32
  }
  func.func @transform_7(%arg0: i32) -> (i32, i32) {
    %c0_i32 = arith.constant 0 : i32
    %c0_i32_0 = arith.constant 0 : i32
    %c0_i32_1 = arith.constant 0 : i32
    return %c0_i32, %c0_i32_0 : i32, i32
  }
  func.func @transform_8(%arg0: i32) -> (i32, i32) {
    %c0_i32 = arith.constant 0 : i32
    %c0_i32_0 = arith.constant 0 : i32
    %c0_i32_1 = arith.constant 0 : i32
    return %c0_i32, %c0_i32_0 : i32, i32
  }
  func.func @transform_9(%arg0: i32) -> (i32, i32) {
    %c0_i32 = arith.constant 0 : i32
    %c0_i32_0 = arith.constant 0 : i32
    %c0_i32_1 = arith.constant 0 : i32
    return %c0_i32, %c0_i32_0 : i32, i32
  }
  func.func @transform_10(%arg0: i32) -> (i32, i32) {
    %c0_i32 = arith.constant 0 : i32
    %c0_i32_0 = arith.constant 0 : i32
    %c0_i32_1 = arith.constant 0 : i32
    return %c0_i32, %c0_i32_0 : i32, i32
  }
  func.func @transform_11(%arg0: i32) -> (i32, i32, i32) {
    %c0_i32 = arith.constant 0 : i32
    %c0_i32_0 = arith.constant 0 : i32
    %c0_i32_1 = arith.constant 0 : i32
    return %arg0, %c0_i32, %c0_i32_0 : i32, i32, i32
  }
}

</mosaic_0001>

<llo_original>
// kernel: tpu_custom_call.1
$region0: #{tpu_custom_call.1}
  #allocation0 [shape = 'u32[]', space=smem, size = 0x4, offset = 0x4, fixed_abs, tag = 'smem constant byte address 0x4 - core index']
  #allocation1 [shape = 'u32[72,128]{1,0:T(1,128)}', space=vmem, size = 0x9000, scoped, tag = 'internal scratch']
  #allocation2 [shape = 'f32[1,1]{1,0:T(1,128)S(1)}', space=vmem, size = 0x200, scoped, tag = 'scoped memory for tpu_custom_call.1']
  %s0 = inlined_call_operand.vmem [shape: f32[128,32], index: 0, kind: input, shape index: {}]
  %s1 = inlined_call_operand.vmem [shape: f32[32,16], index: 1, kind: input, shape index: {}]
  %s2 = inlined_call_operand.vmem [shape: f32[1,16], index: 2, kind: input, shape index: {}]
  %s3 = inlined_call_operand.vmem [shape: f32[1,16], index: 3, kind: input, shape index: {}]
  %s4 = inlined_call_operand.vmem [shape: f32[1,16], index: 4, kind: input, shape index: {}]
  %s5 = inlined_call_operand.vmem [shape: f32[16,8], index: 5, kind: input, shape index: {}]
  %s6 = inlined_call_operand.vmem [shape: f32[1,8], index: 6, kind: input, shape index: {}]
  %s7 = inlined_call_operand.vmem [shape: f32[1,8], index: 7, kind: input, shape index: {}]
  %s8 = inlined_call_operand.vmem [shape: f32[1,8], index: 8, kind: input, shape index: {}]
  %s9 = inlined_call_operand.vmem [shape: f32[8,8], index: 9, kind: input, shape index: {}]
  %s10 = inlined_call_operand.<no memory space> [shape: f32[1,1], index: 10, kind: input, shape index: {}]
  %s11 = inlined_call_operand.hbm [shape: f32[1,1,128], index: 11, kind: output, shape index: {}]
  %s12 = sld [smem:[#allocation0]]
  $region54: #{tpu_custom_call.1} parent=0
    _
  %s14 = ssub.s32 1, %s12
  %s15 = scalar_select 0, %s14, %s12
  %v16 = vstv %s10
  %17 = vst [vmem:[#allocation2] sm:$0x1] %v16
  $region1: #{tpu_custom_call.1} parent=0
    #allocation3 [shape = 'u8[512]{0}', space=vmem, size = 0x400, scoped, tag = 'output window, operand 0, single buffered']
    #allocation4 [shape = 's32[1]{0}', space=sflag, size = 0x4, scoped, tag = 'scoped memory for tpu_custom_call.1']
    %18 = vsyncpa [#allocation4], 0
    // Predicated region
    $region2: #{tpu_custom_call.1} parent=1 // pred_check
      _
    $region3: #{tpu_custom_call.1} parent=1 // pred_check_branch
      %20 = sbr.rel (0) target = $region5
    $region4: #{tpu_custom_call.1} parent=1 // pred_region
      _
    $region5: #{tpu_custom_call.1} parent=1 // pred_fallthru
      _
    // Predicated region
    $region6: #{tpu_custom_call.1} parent=1 // pred_check
      _
    $region7: #{tpu_custom_call.1} parent=1 // pred_check_branch
      %22 = sbr.rel (0) target = $region9
    $region8: #{tpu_custom_call.1} parent=1 // pred_region
      _
    $region9: #{tpu_custom_call.1} parent=1 // pred_fallthru
      _
    // Predicated region
    $region10: #{tpu_custom_call.1} parent=1 // pred_check
      _
    $region11: #{tpu_custom_call.1} parent=1 // pred_check_branch
      %24 = sbr.rel (0) target = $region13
    $region12: #{tpu_custom_call.1} parent=1 // pred_region
      _
    $region13: #{tpu_custom_call.1} parent=1 // pred_fallthru
      _
    // Predicated region
    $region14: #{tpu_custom_call.1} parent=1 // pred_check
      _
    $region15: #{tpu_custom_call.1} parent=1 // pred_check_branch
      %26 = sbr.rel (0) target = $region17
    $region16: #{tpu_custom_call.1} parent=1 // pred_region
      _
    $region17: #{tpu_custom_call.1} parent=1 // pred_fallthru
      _
    // Predicated region
    $region18: #{tpu_custom_call.1} parent=1 // pred_check
      _
    $region19: #{tpu_custom_call.1} parent=1 // pred_check_branch
      %28 = sbr.rel (0) target = $region21
    $region20: #{tpu_custom_call.1} parent=1 // pred_region
      _
    $region21: #{tpu_custom_call.1} parent=1 // pred_fallthru
      _
    // Predicated region
    $region22: #{tpu_custom_call.1} parent=1 // pred_check
      _
    $region23: #{tpu_custom_call.1} parent=1 // pred_check_branch
      %30 = sbr.rel (0) target = $region25
    $region24: #{tpu_custom_call.1} parent=1 // pred_region
      _
    $region25: #{tpu_custom_call.1} parent=1 // pred_fallthru
      _
    // Predicated region
    $region26: #{tpu_custom_call.1} parent=1 // pred_check
      _
    $region27: #{tpu_custom_call.1} parent=1 // pred_check_branch
      %32 = sbr.rel (0) target = $region29
    $region28: #{tpu_custom_call.1} parent=1 // pred_region
      _
    $region29: #{tpu_custom_call.1} parent=1 // pred_fallthru
      _
    // Predicated region
    $region30: #{tpu_custom_call.1} parent=1 // pred_check
      _
    $region31: #{tpu_custom_call.1} parent=1 // pred_check_branch
      %34 = sbr.rel (0) target = $region33
    $region32: #{tpu_custom_call.1} parent=1 // pred_region
      _
    $region33: #{tpu_custom_call.1} parent=1 // pred_fallthru
      _
    // Predicated region
    $region34: #{tpu_custom_call.1} parent=1 // pred_check
      _
    $region35: #{tpu_custom_call.1} parent=1 // pred_check_branch
      %36 = sbr.rel (0) target = $region37
    $region36: #{tpu_custom_call.1} parent=1 // pred_region
      _
    $region37: #{tpu_custom_call.1} parent=1 // pred_fallthru
      _
    // Predicated region
    $region38: #{tpu_custom_call.1} parent=1 // pred_check
      _
    $region39: #{tpu_custom_call.1} parent=1 // pred_check_branch
      %38 = sbr.rel (0) target = $region41
    $region40: #{tpu_custom_call.1} parent=1 // pred_region
      _
    $region41: #{tpu_custom_call.1} parent=1 // pred_fallthru
      _
    // Predicated region
    $region42: #{tpu_custom_call.1} parent=1 // pred_check
      _
    $region43: #{tpu_custom_call.1} parent=1 // pred_check_branch
      %40 = sbr.rel (0) target = $region45
    $region44: #{tpu_custom_call.1} parent=1 // pred_region
      _
    $region45: #{tpu_custom_call.1} parent=1 // pred_fallthru
      _
    %v41 = vld [vmem:[%s0] sm:$0xff]
    %v42 = vld [vmem:[%s0 + $0x8] sm:$0xff]
    %v43 = vld [vmem:[%s0 + $0x10] sm:$0xff]
    %v44 = vld [vmem:[%s0 + $0x18] sm:$0xff]
    %v45 = vld [vmem:[%s0 + $0x20] sm:$0xff]
    %v46 = vld [vmem:[%s0 + $0x28] sm:$0xff]
    %v47 = vld [vmem:[%s0 + $0x30] sm:$0xff]
    %v48 = vld [vmem:[%s0 + $0x38] sm:$0xff]
    %v49 = vld [vmem:[%s0 + $0x40] sm:$0xff]
    %v50 = vld [vmem:[%s0 + $0x48] sm:$0xff]
    %v51 = vld [vmem:[%s0 + $0x50] sm:$0xff]
    %v52 = vld [vmem:[%s0 + $0x58] sm:$0xff]
    %v53 = vld [vmem:[%s0 + $0x60] sm:$0xff]
    %v54 = vld [vmem:[%s0 + $0x68] sm:$0xff]
    %v55 = vld [vmem:[%s0 + $0x70] sm:$0xff]
    %v56 = vld [vmem:[%s0 + $0x78] sm:$0xff]
    %v57 = vld [vmem:[%s1] sm:$0xff]
    %v58 = vld [vmem:[%s1 + $0x8] sm:$0xff]
    %v59 = vld [vmem:[%s1 + $0x10] sm:$0xff]
    %v60 = vld [vmem:[%s1 + $0x18] sm:$0xff]
    %v61 = vld [vmem:[%s2] sm:$0x1]
    %v63 = vperm.slane %v61, 0
    %vm65 = vcmask 261120
    %v67 = vsel %vm65, %v41, 0
    %v70 = vsel %vm65, %v42, 0
    %v73 = vsel %vm65, %v43, 0
    %v76 = vsel %vm65, %v44, 0
    %v79 = vsel %vm65, %v45, 0
    %v82 = vsel %vm65, %v46, 0
    %v85 = vsel %vm65, %v47, 0
    %v88 = vsel %vm65, %v48, 0
    %v91 = vsel %vm65, %v49, 0
    %v94 = vsel %vm65, %v50, 0
    %v97 = vsel %vm65, %v51, 0
    %v100 = vsel %vm65, %v52, 0
    %v103 = vsel %vm65, %v53, 0
    %v106 = vsel %vm65, %v54, 0
    %v109 = vsel %vm65, %v55, 0
    %v112 = vsel %vm65, %v56, 0
    %114 = vmatpush.msra.mxu0 0.0
    %115 = vmatpush.msra.mxu0 0.0
    %116 = vmatpush.msra.mxu0 0.0
    %117 = vmatpush.msra.mxu0 0.0
    %118 = vmatpush.msra.mxu0 0.0
    %119 = vmatpush.msra.mxu0 0.0
    %120 = vmatpush.msra.mxu0 0.0
    %121 = vmatpush.msra.mxu0 0.0
    %122 = vmatpush.msra.mxu0 0.0
    %123 = vmatpush.msra.mxu0 0.0
    %124 = vmatpush.msra.mxu0 0.0
    %125 = vmatpush.msra.mxu0 0.0
    %126 = vmatpush.msra.mxu0 %v60
    %127 = vmatpush.msra.mxu0 %v59
    %128 = vmatpush.msra.mxu0 %v58
    %129 = vmatpush.msra.mxu0 %v57
    %130 = vmatmul.f32.gmra.mxu0 %v67
    %v131 = vpop.f32.mrf.mxu0
    %v132 = vadd.f32 %v63, %v131
    %133 = vmatmul.f32.gmra.mxu0 %v70
    %v134 = vpop.f32.mrf.mxu0
    %v135 = vadd.f32 %v63, %v134
    %136 = vmatmul.f32.gmra.mxu0 %v73
    %v137 = vpop.f32.mrf.mxu0
    %v138 = vadd.f32 %v63, %v137
    %139 = vmatmul.f32.gmra.mxu0 %v76
    %v140 = vpop.f32.mrf.mxu0
    %v141 = vadd.f32 %v63, %v140
    %142 = vmatmul.f32.gmra.mxu0 %v79
    %v143 = vpop.f32.mrf.mxu0
    %v144 = vadd.f32 %v63, %v143
    %145 = vmatmul.f32.gmra.mxu0 %v82
    %v146 = vpop.f32.mrf.mxu0
    %v147 = vadd.f32 %v63, %v146
    %148 = vmatmul.f32.gmra.mxu0 %v85
    %v149 = vpop.f32.mrf.mxu0
    %v150 = vadd.f32 %v63, %v149
    %151 = vmatmul.f32.gmra.mxu0 %v88
    %v152 = vpop.f32.mrf.mxu0
    %v153 = vadd.f32 %v63, %v152
    %154 = vmatmul.f32.gmra.mxu0 %v91
    %v155 = vpop.f32.mrf.mxu0
    %v156 = vadd.f32 %v63, %v155
    %157 = vmatmul.f32.gmra.mxu0 %v94
    %v158 = vpop.f32.mrf.mxu0
    %v159 = vadd.f32 %v63, %v158
    %160 = vmatmul.f32.gmra.mxu0 %v97
    %v161 = vpop.f32.mrf.mxu0
    %v162 = vadd.f32 %v63, %v161
    %163 = vmatmul.f32.gmra.mxu0 %v100
    %v164 = vpop.f32.mrf.mxu0
    %v165 = vadd.f32 %v63, %v164
    %166 = vmatmul.f32.gmra.mxu0 %v103
    %v167 = vpop.f32.mrf.mxu0
    %v168 = vadd.f32 %v63, %v167
    %169 = vmatmul.f32.gmra.mxu0 %v106
    %v170 = vpop.f32.mrf.mxu0
    %v171 = vadd.f32 %v63, %v170
    %172 = vmatmul.f32.gmra.mxu0 %v109
    %v173 = vpop.f32.mrf.mxu0
    %v174 = vadd.f32 %v63, %v173
    %175 = vmatmul.f32.gmra.mxu0 %v112
    %v176 = vpop.f32.mrf.mxu0
    %v177 = vadd.f32 %v63, %v176
    %178 = vdwg.mxu0
    %v179 = vld [vmem:[%s3] sm:$0x1]
    %v180 = vld [vmem:[%s4] sm:$0x1]
    %vm181 = vcmask 130048
    %v182 = vsel %vm181, %v132, 0.0
    %183 = vadd.xlane.f32.xlu0 %v182
    %v184 = vpop.xlane.xlu0 %183
    %v185 = vsel %vm181, %v135, 0.0
    %186 = vadd.xlane.f32.xlu0 %v185
    %v187 = vpop.xlane.xlu0 %186
    %v188 = vsel %vm181, %v138, 0.0
    %189 = vadd.xlane.f32.xlu0 %v188
    %v190 = vpop.xlane.xlu0 %189
    %v191 = vsel %vm181, %v141, 0.0
    %192 = vadd.xlane.f32.xlu0 %v191
    %v193 = vpop.xlane.xlu0 %192
    %v194 = vsel %vm181, %v144, 0.0
    %195 = vadd.xlane.f32.xlu0 %v194
    %v196 = vpop.xlane.xlu0 %195
    %v197 = vsel %vm181, %v147, 0.0
    %198 = vadd.xlane.f32.xlu0 %v197
    %v199 = vpop.xlane.xlu0 %198
    %v200 = vsel %vm181, %v150, 0.0
    %201 = vadd.xlane.f32.xlu0 %v200
    %v202 = vpop.xlane.xlu0 %201
    %v203 = vsel %vm181, %v153, 0.0
    %204 = vadd.xlane.f32.xlu0 %v203
    %v205 = vpop.xlane.xlu0 %204
    %v206 = vsel %vm181, %v156, 0.0
    %207 = vadd.xlane.f32.xlu0 %v206
    %v208 = vpop.xlane.xlu0 %207
    %v209 = vsel %vm181, %v159, 0.0
    %210 = vadd.xlane.f32.xlu0 %v209
    %v211 = vpop.xlane.xlu0 %210
    %v212 = vsel %vm181, %v162, 0.0
    %213 = vadd.xlane.f32.xlu0 %v212
    %v214 = vpop.xlane.xlu0 %213
    %v215 = vsel %vm181, %v165, 0.0
    %216 = vadd.xlane.f32.xlu0 %v215
    %v217 = vpop.xlane.xlu0 %216
    %v218 = vsel %vm181, %v168, 0.0
    %219 = vadd.xlane.f32.xlu0 %v218
    %v220 = vpop.xlane.xlu0 %219
    %v221 = vsel %vm181, %v171, 0.0
    %222 = vadd.xlane.f32.xlu0 %v221
    %v223 = vpop.xlane.xlu0 %222
    %v224 = vsel %vm181, %v174, 0.0
    %225 = vadd.xlane.f32.xlu0 %v224
    %v226 = vpop.xlane.xlu0 %225
    %v227 = vsel %vm181, %v177, 0.0
    %228 = vadd.xlane.f32.xlu0 %v227
    %v229 = vpop.xlane.xlu0 %228
    %v230 = vrcp.pop 16.0
    %v231 = vmul.f32 16.0, %v230
    %v232 = vsub.f32 1.0, %v231
    %v233 = vmul.f32 %v230, %v232
    %v234 = vadd.f32 %v230, %v233
    %vm235 = vweird.f32 %v230
    %v236 = vsel %vm235, %v230, %v234
    %v237 = vmul.f32 %v184, %v236
    %v238 = vmul.f32 %v187, %v236
    %v239 = vmul.f32 %v190, %v236
    %v240 = vmul.f32 %v193, %v236
    %v241 = vmul.f32 %v196, %v236
    %v242 = vmul.f32 %v199, %v236
    %v243 = vmul.f32 %v202, %v236
    %v244 = vmul.f32 %v205, %v236
    %v245 = vmul.f32 %v208, %v236
    %v246 = vmul.f32 %v211, %v236
    %v247 = vmul.f32 %v214, %v236
    %v248 = vmul.f32 %v217, %v236
    %v249 = vmul.f32 %v220, %v236
    %v250 = vmul.f32 %v223, %v236
    %v251 = vmul.f32 %v226, %v236
    %v252 = vmul.f32 %v229, %v236
    %v253 = vmul.f32 %v132, %v132
    %v254 = vmul.f32 %v135, %v135
    %v255 = vmul.f32 %v138, %v138
    %v256 = vmul.f32 %v141, %v141
    %v257 = vmul.f32 %v144, %v144
    %v258 = vmul.f32 %v147, %v147
    %v259 = vmul.f32 %v150, %v150
    %v260 = vmul.f32 %v153, %v153
    %v261 = vmul.f32 %v156, %v156
    %v262 = vmul.f32 %v159, %v159
    %v263 = vmul.f32 %v162, %v162
    %v264 = vmul.f32 %v165, %v165
    %v265 = vmul.f32 %v168, %v168
    %v266 = vmul.f32 %v171, %v171
    %v267 = vmul.f32 %v174, %v174
    %v268 = vmul.f32 %v177, %v177
    %v269 = vsel %vm181, %v253, 0.0
    %270 = vadd.xlane.f32.xlu0 %v269
    %v271 = vpop.xlane.xlu0 %270
    %v272 = vsel %vm181, %v254, 0.0
    %273 = vadd.xlane.f32.xlu0 %v272
    %v274 = vpop.xlane.xlu0 %273
    %v275 = vsel %vm181, %v255, 0.0
    %276 = vadd.xlane.f32.xlu0 %v275
    %v277 = vpop.xlane.xlu0 %276
    %v278 = vsel %vm181, %v256, 0.0
    %279 = vadd.xlane.f32.xlu0 %v278
    %v280 = vpop.xlane.xlu0 %279
    %v281 = vsel %vm181, %v257, 0.0
    %282 = vadd.xlane.f32.xlu0 %v281
    %v283 = vpop.xlane.xlu0 %282
    %v284 = vsel %vm181, %v258, 0.0
    %285 = vadd.xlane.f32.xlu0 %v284
    %v286 = vpop.xlane.xlu0 %285
    %v287 = vsel %vm181, %v259, 0.0
    %288 = vadd.xlane.f32.xlu0 %v287
    %v289 = vpop.xlane.xlu0 %288
    %v290 = vsel %vm181, %v260, 0.0
    %291 = vadd.xlane.f32.xlu0 %v290
    %v292 = vpop.xlane.xlu0 %291
    %v293 = vsel %vm181, %v261, 0.0
    %294 = vadd.xlane.f32.xlu0 %v293
    %v295 = vpop.xlane.xlu0 %294
    %v296 = vsel %vm181, %v262, 0.0
    %297 = vadd.xlane.f32.xlu0 %v296
    %v298 = vpop.xlane.xlu0 %297
    %v299 = vsel %vm181, %v263, 0.0
    %300 = vadd.xlane.f32.xlu0 %v299
    %v301 = vpop.xlane.xlu0 %300
    %v302 = vsel %vm181, %v264, 0.0
    %303 = vadd.xlane.f32.xlu0 %v302
    %v304 = vpop.xlane.xlu0 %303
    %v305 = vsel %vm181, %v265, 0.0
    %306 = vadd.xlane.f32.xlu0 %v305
    %v307 = vpop.xlane.xlu0 %306
    %v308 = vsel %vm181, %v266, 0.0
    %309 = vadd.xlane.f32.xlu0 %v308
    %v310 = vpop.xlane.xlu0 %309
    %v311 = vsel %vm181, %v267, 0.0
    %312 = vadd.xlane.f32.xlu0 %v311
    %v313 = vpop.xlane.xlu0 %312
    %v314 = vsel %vm181, %v268, 0.0
    %315 = vadd.xlane.f32.xlu0 %v314
    %v316 = vpop.xlane.xlu0 %315
    %v317 = vmul.f32 %v271, %v236
    %v318 = vmul.f32 %v274, %v236
    %v319 = vmul.f32 %v277, %v236
    %v320 = vmul.f32 %v280, %v236
    %v321 = vmul.f32 %v283, %v236
    %v322 = vmul.f32 %v286, %v236
    %v323 = vmul.f32 %v289, %v236
    %v324 = vmul.f32 %v292, %v236
    %v325 = vmul.f32 %v295, %v236
    %v326 = vmul.f32 %v298, %v236
    %v327 = vmul.f32 %v301, %v236
    %v328 = vmul.f32 %v304, %v236
    %v329 = vmul.f32 %v307, %v236
    %v330 = vmul.f32 %v310, %v236
    %v331 = vmul.f32 %v313, %v236
    %v332 = vmul.f32 %v316, %v236
    %v333 = vmul.f32 %v237, %v237
    %v334 = vmul.f32 %v238, %v238
    %v335 = vmul.f32 %v239, %v239
    %v336 = vmul.f32 %v240, %v240
    %v337 = vmul.f32 %v241, %v241
    %v338 = vmul.f32 %v242, %v242
    %v339 = vmul.f32 %v243, %v243
    %v340 = vmul.f32 %v244, %v244
    %v341 = vmul.f32 %v245, %v245
    %v342 = vmul.f32 %v246, %v246
    %v343 = vmul.f32 %v247, %v247
    %v344 = vmul.f32 %v248, %v248
    %v345 = vmul.f32 %v249, %v249
    %v346 = vmul.f32 %v250, %v250
    %v347 = vmul.f32 %v251, %v251
    %v348 = vmul.f32 %v252, %v252
    %v349 = vsub.f32 %v317, %v333
    %v350 = vsub.f32 %v318, %v334
    %v351 = vsub.f32 %v319, %v335
    %v352 = vsub.f32 %v320, %v336
    %v353 = vsub.f32 %v321, %v337
    %v354 = vsub.f32 %v322, %v338
    %v355 = vsub.f32 %v323, %v339
    %v356 = vsub.f32 %v324, %v340
    %v357 = vsub.f32 %v325, %v341
    %v358 = vsub.f32 %v326, %v342
    %v359 = vsub.f32 %v327, %v343
    %v360 = vsub.f32 %v328, %v344
    %v361 = vsub.f32 %v329, %v345
    %v362 = vsub.f32 %v330, %v346
    %v363 = vsub.f32 %v331, %v347
    %v364 = vsub.f32 %v332, %v348
    %v365 = vmax.f32 %v349, 0.0
    %v366 = vmax.f32 %v350, 0.0
    %v367 = vmax.f32 %v351, 0.0
    %v368 = vmax.f32 %v352, 0.0
    %v369 = vmax.f32 %v353, 0.0
    %v370 = vmax.f32 %v354, 0.0
    %v371 = vmax.f32 %v355, 0.0
    %v372 = vmax.f32 %v356, 0.0
    %v373 = vmax.f32 %v357, 0.0
    %v374 = vmax.f32 %v358, 0.0
    %v375 = vmax.f32 %v359, 0.0
    %v376 = vmax.f32 %v360, 0.0
    %v377 = vmax.f32 %v361, 0.0
    %v378 = vmax.f32 %v362, 0.0
    %v379 = vmax.f32 %v363, 0.0
    %v380 = vmax.f32 %v364, 0.0
    %v381 = vsub.f32 %v132, %v237
    %v382 = vsub.f32 %v135, %v238
    %v383 = vsub.f32 %v138, %v239
    %v384 = vsub.f32 %v141, %v240
    %v385 = vsub.f32 %v144, %v241
    %v386 = vsub.f32 %v147, %v242
    %v387 = vsub.f32 %v150, %v243
    %v388 = vsub.f32 %v153, %v244
    %v389 = vsub.f32 %v156, %v245
    %v390 = vsub.f32 %v159, %v246
    %v391 = vsub.f32 %v162, %v247
    %v392 = vsub.f32 %v165, %v248
    %v393 = vsub.f32 %v168, %v249
    %v394 = vsub.f32 %v171, %v250
    %v395 = vsub.f32 %v174, %v251
    %v396 = vsub.f32 %v177, %v252
    %v397 = vadd.f32 %v365, 1e-05
    %v398 = vadd.f32 %v366, 1e-05
    %v399 = vadd.f32 %v367, 1e-05
    %v400 = vadd.f32 %v368, 1e-05
    %v401 = vadd.f32 %v369, 1e-05
    %v402 = vadd.f32 %v370, 1e-05
    %v403 = vadd.f32 %v371, 1e-05
    %v404 = vadd.f32 %v372, 1e-05
    %v405 = vadd.f32 %v373, 1e-05
    %v406 = vadd.f32 %v374, 1e-05
    %v407 = vadd.f32 %v375, 1e-05
    %v408 = vadd.f32 %v376, 1e-05
    %v409 = vadd.f32 %v377, 1e-05
    %v410 = vadd.f32 %v378, 1e-05
    %v411 = vadd.f32 %v379, 1e-05
    %v412 = vadd.f32 %v380, 1e-05
    %v413 = vrsqrt.pop %v397
    %v414 = vmul.f32 %v413, %v397
    %v415 = vmul.f32 %v414, %v413
    %v416 = vmul.f32 0.5, %v415
    %v417 = vsub.f32 1.5, %v416
    %v418 = vmul.f32 %v413, %v417
    %vm419 = vweird.f32 %v397
    %vm420 = vweird.f32 %v413
    %vm421 = vmor %vm419, %vm420
    %v422 = vsel %vm421, %v413, %v418
    %v423 = vrsqrt.pop %v398
    %v424 = vmul.f32 %v423, %v398
    %v425 = vmul.f32 %v424, %v423
    %v426 = vmul.f32 0.5, %v425
    %v427 = vsub.f32 1.5, %v426
    %v428 = vmul.f32 %v423, %v427
    %vm429 = vweird.f32 %v398
    %vm430 = vweird.f32 %v423
    %vm431 = vmor %vm429, %vm430
    %v432 = vsel %vm431, %v423, %v428
    %v433 = vrsqrt.pop %v399
    %v434 = vmul.f32 %v433, %v399
    %v435 = vmul.f32 %v434, %v433
    %v436 = vmul.f32 0.5, %v435
    %v437 = vsub.f32 1.5, %v436
    %v438 = vmul.f32 %v433, %v437
    %vm439 = vweird.f32 %v399
    %vm440 = vweird.f32 %v433
    %vm441 = vmor %vm439, %vm440
    %v442 = vsel %vm441, %v433, %v438
    %v443 = vrsqrt.pop %v400
    %v444 = vmul.f32 %v443, %v400
    %v445 = vmul.f32 %v444, %v443
    %v446 = vmul.f32 0.5, %v445
    %v447 = vsub.f32 1.5, %v446
    %v448 = vmul.f32 %v443, %v447
    %vm449 = vweird.f32 %v400
    %vm450 = vweird.f32 %v443
    %vm451 = vmor %vm449, %vm450
    %v452 = vsel %vm451, %v443, %v448
    %v453 = vrsqrt.pop %v401
    %v454 = vmul.f32 %v453, %v401
    %v455 = vmul.f32 %v454, %v453
    %v456 = vmul.f32 0.5, %v455
    %v457 = vsub.f32 1.5, %v456
    %v458 = vmul.f32 %v453, %v457
    %vm459 = vweird.f32 %v401
    %vm460 = vweird.f32 %v453
    %vm461 = vmor %vm459, %vm460
    %v462 = vsel %vm461, %v453, %v458
    %v463 = vrsqrt.pop %v402
    %v464 = vmul.f32 %v463, %v402
    %v465 = vmul.f32 %v464, %v463
    %v466 = vmul.f32 0.5, %v465
    %v467 = vsub.f32 1.5, %v466
    %v468 = vmul.f32 %v463, %v467
    %vm469 = vweird.f32 %v402
    %vm470 = vweird.f32 %v463
    %vm471 = vmor %vm469, %vm470
    %v472 = vsel %vm471, %v463, %v468
    %v473 = vrsqrt.pop %v403
    %v474 = vmul.f32 %v473, %v403
    %v475 = vmul.f32 %v474, %v473
    %v476 = vmul.f32 0.5, %v475
    %v477 = vsub.f32 1.5, %v476
    %v478 = vmul.f32 %v473, %v477
    %vm479 = vweird.f32 %v403
    %vm480 = vweird.f32 %v473
    %vm481 = vmor %vm479, %vm480
    %v482 = vsel %vm481, %v473, %v478
    %v483 = vrsqrt.pop %v404
    %v484 = vmul.f32 %v483, %v404
    %v485 = vmul.f32 %v484, %v483
    %v486 = vmul.f32 0.5, %v485
    %v487 = vsub.f32 1.5, %v486
    %v488 = vmul.f32 %v483, %v487
    %vm489 = vweird.f32 %v404
    %vm490 = vweird.f32 %v483
    %vm491 = vmor %vm489, %vm490
    %v492 = vsel %vm491, %v483, %v488
    %v493 = vrsqrt.pop %v405
    %v494 = vmul.f32 %v493, %v405
    %v495 = vmul.f32 %v494, %v493
    %v496 = vmul.f32 0.5, %v495
    %v497 = vsub.f32 1.5, %v496
    %v498 = vmul.f32 %v493, %v497
    %vm499 = vweird.f32 %v405
    %vm500 = vweird.f32 %v493
    %vm501 = vmor %vm499, %vm500
    %v502 = vsel %vm501, %v493, %v498
    %v503 = vrsqrt.pop %v406
    %v504 = vmul.f32 %v503, %v406
    %v505 = vmul.f32 %v504, %v503
    %v506 = vmul.f32 0.5, %v505
    %v507 = vsub.f32 1.5, %v506
    %v508 = vmul.f32 %v503, %v507
    %vm509 = vweird.f32 %v406
    %vm510 = vweird.f32 %v503
    %vm511 = vmor %vm509, %vm510
    %v512 = vsel %vm511, %v503, %v508
    %v513 = vrsqrt.pop %v407
    %v514 = vmul.f32 %v513, %v407
    %v515 = vmul.f32 %v514, %v513
    %v516 = vmul.f32 0.5, %v515
    %v517 = vsub.f32 1.5, %v516
    %v518 = vmul.f32 %v513, %v517
    %vm519 = vweird.f32 %v407
    %vm520 = vweird.f32 %v513
    %vm521 = vmor %vm519, %vm520
    %v522 = vsel %vm521, %v513, %v518
    %v523 = vrsqrt.pop %v408
    %v524 = vmul.f32 %v523, %v408
    %v525 = vmul.f32 %v524, %v523
    %v526 = vmul.f32 0.5, %v525
    %v527 = vsub.f32 1.5, %v526
    %v528 = vmul.f32 %v523, %v527
    %vm529 = vweird.f32 %v408
    %vm530 = vweird.f32 %v523
    %vm531 = vmor %vm529, %vm530
    %v532 = vsel %vm531, %v523, %v528
    %v533 = vrsqrt.pop %v409
    %v534 = vmul.f32 %v533, %v409
    %v535 = vmul.f32 %v534, %v533
    %v536 = vmul.f32 0.5, %v535
    %v537 = vsub.f32 1.5, %v536
    %v538 = vmul.f32 %v533, %v537
    %vm539 = vweird.f32 %v409
    %vm540 = vweird.f32 %v533
    %vm541 = vmor %vm539, %vm540
    %v542 = vsel %vm541, %v533, %v538
    %v543 = vrsqrt.pop %v410
    %v544 = vmul.f32 %v543, %v410
    %v545 = vmul.f32 %v544, %v543
    %v546 = vmul.f32 0.5, %v545
    %v547 = vsub.f32 1.5, %v546
    %v548 = vmul.f32 %v543, %v547
    %vm549 = vweird.f32 %v410
    %vm550 = vweird.f32 %v543
    %vm551 = vmor %vm549, %vm550
    %v552 = vsel %vm551, %v543, %v548
    %v553 = vrsqrt.pop %v411
    %v554 = vmul.f32 %v553, %v411
    %v555 = vmul.f32 %v554, %v553
    %v556 = vmul.f32 0.5, %v555
    %v557 = vsub.f32 1.5, %v556
    %v558 = vmul.f32 %v553, %v557
    %vm559 = vweird.f32 %v411
    %vm560 = vweird.f32 %v553
    %vm561 = vmor %vm559, %vm560
    %v562 = vsel %vm561, %v553, %v558
    %v563 = vrsqrt.pop %v412
    %v564 = vmul.f32 %v563, %v412
    %v565 = vmul.f32 %v564, %v563
    %v566 = vmul.f32 0.5, %v565
    %v567 = vsub.f32 1.5, %v566
    %v568 = vmul.f32 %v563, %v567
    %vm569 = vweird.f32 %v412
    %vm570 = vweird.f32 %v563
    %vm571 = vmor %vm569, %vm570
    %v572 = vsel %vm571, %v563, %v568
    %v573 = vmul.f32 %v381, %v422
    %v574 = vmul.f32 %v382, %v432
    %v575 = vmul.f32 %v383, %v442
    %v576 = vmul.f32 %v384, %v452
    %v577 = vmul.f32 %v385, %v462
    %v578 = vmul.f32 %v386, %v472
    %v579 = vmul.f32 %v387, %v482
    %v580 = vmul.f32 %v388, %v492
    %v581 = vmul.f32 %v389, %v502
    %v582 = vmul.f32 %v390, %v512
    %v583 = vmul.f32 %v391, %v522
    %v584 = vmul.f32 %v392, %v532
    %v585 = vmul.f32 %v393, %v542
    %v586 = vmul.f32 %v394, %v552
    %v587 = vmul.f32 %v395, %v562
    %v588 = vmul.f32 %v396, %v572
    %v590 = vperm.slane %v179, 0
    %v592 = vmul.f32 %v573, %v590
    %v593 = vmul.f32 %v574, %v590
    %v594 = vmul.f32 %v575, %v590
    %v595 = vmul.f32 %v576, %v590
    %v596 = vmul.f32 %v577, %v590
    %v597 = vmul.f32 %v578, %v590
    %v598 = vmul.f32 %v579, %v590
    %v599 = vmul.f32 %v580, %v590
    %v600 = vmul.f32 %v581, %v590
    %v601 = vmul.f32 %v582, %v590
    %v602 = vmul.f32 %v583, %v590
    %v603 = vmul.f32 %v584, %v590
    %v604 = vmul.f32 %v585, %v590
    %v605 = vmul.f32 %v586, %v590
    %v606 = vmul.f32 %v587, %v590
    %v607 = vmul.f32 %v588, %v590
    %v609 = vperm.slane %v180, 0
    %v611 = vadd.f32 %v592, %v609
    %v612 = vadd.f32 %v593, %v609
    %v613 = vadd.f32 %v594, %v609
    %v614 = vadd.f32 %v595, %v609
    %v615 = vadd.f32 %v596, %v609
    %v616 = vadd.f32 %v597, %v609
    %v617 = vadd.f32 %v598, %v609
    %v618 = vadd.f32 %v599, %v609
    %v619 = vadd.f32 %v600, %v609
    %v620 = vadd.f32 %v601, %v609
    %v621 = vadd.f32 %v602, %v609
    %v622 = vadd.f32 %v603, %v609
    %v623 = vadd.f32 %v604, %v609
    %v624 = vadd.f32 %v605, %v609
    %v625 = vadd.f32 %v606, %v609
    %v626 = vadd.f32 %v607, %v609
    %v627 = vmax.f32 %v611, 0.0
    %v628 = vmax.f32 %v612, 0.0
    %v629 = vmax.f32 %v613, 0.0
    %v630 = vmax.f32 %v614, 0.0
    %v631 = vmax.f32 %v615, 0.0
    %v632 = vmax.f32 %v616, 0.0
    %v633 = vmax.f32 %v617, 0.0
    %v634 = vmax.f32 %v618, 0.0
    %v635 = vmax.f32 %v619, 0.0
    %v636 = vmax.f32 %v620, 0.0
    %v637 = vmax.f32 %v621, 0.0
    %v638 = vmax.f32 %v622, 0.0
    %v639 = vmax.f32 %v623, 0.0
    %v640 = vmax.f32 %v624, 0.0
    %v641 = vmax.f32 %v625, 0.0
    %v642 = vmax.f32 %v626, 0.0
    %v643 = vld [vmem:[%s5] sm:$0xff]
    %v644 = vld [vmem:[%s5 + $0x8] sm:$0xff]
    %v645 = vld [vmem:[%s6] sm:$0x1]
    %v647 = vperm.slane %v645, 0
    %v650 = vsel %vm181, %v627, 0
    %v653 = vsel %vm181, %v628, 0
    %v656 = vsel %vm181, %v629, 0
    %v659 = vsel %vm181, %v630, 0
    %v662 = vsel %vm181, %v631, 0
    %v665 = vsel %vm181, %v632, 0
    %v668 = vsel %vm181, %v633, 0
    %v671 = vsel %vm181, %v634, 0
    %v674 = vsel %vm181, %v635, 0
    %v677 = vsel %vm181, %v636, 0
    %v680 = vsel %vm181, %v637, 0
    %v683 = vsel %vm181, %v638, 0
    %v686 = vsel %vm181, %v639, 0
    %v689 = vsel %vm181, %v640, 0
    %v692 = vsel %vm181, %v641, 0
    %v695 = vsel %vm181, %v642, 0
    %697 = vmatpush.msra.mxu0 0.0
    %698 = vmatpush.msra.mxu0 0.0
    %699 = vmatpush.msra.mxu0 0.0
    %700 = vmatpush.msra.mxu0 0.0
    %701 = vmatpush.msra.mxu0 0.0
    %702 = vmatpush.msra.mxu0 0.0
    %703 = vmatpush.msra.mxu0 0.0
    %704 = vmatpush.msra.mxu0 0.0
    %705 = vmatpush.msra.mxu0 0.0
    %706 = vmatpush.msra.mxu0 0.0
    %707 = vmatpush.msra.mxu0 0.0
    %708 = vmatpush.msra.mxu0 0.0
    %709 = vmatpush.msra.mxu0 0.0
    %710 = vmatpush.msra.mxu0 0.0
    %711 = vmatpush.msra.mxu0 %v644
    %712 = vmatpush.msra.mxu0 %v643
    %713 = vmatmul.f32.gmra.mxu0 %v650
    %v714 = vpop.f32.mrf.mxu0
    %v715 = vadd.f32 %v647, %v714
    %716 = vmatmul.f32.gmra.mxu0 %v653
    %v717 = vpop.f32.mrf.mxu0
    %v718 = vadd.f32 %v647, %v717
    %719 = vmatmul.f32.gmra.mxu0 %v656
    %v720 = vpop.f32.mrf.mxu0
    %v721 = vadd.f32 %v647, %v720
    %722 = vmatmul.f32.gmra.mxu0 %v659
    %v723 = vpop.f32.mrf.mxu0
    %v724 = vadd.f32 %v647, %v723
    %725 = vmatmul.f32.gmra.mxu0 %v662
    %v726 = vpop.f32.mrf.mxu0
    %v727 = vadd.f32 %v647, %v726
    %728 = vmatmul.f32.gmra.mxu0 %v665
    %v729 = vpop.f32.mrf.mxu0
    %v730 = vadd.f32 %v647, %v729
    %731 = vmatmul.f32.gmra.mxu0 %v668
    %v732 = vpop.f32.mrf.mxu0
    %v733 = vadd.f32 %v647, %v732
    %734 = vmatmul.f32.gmra.mxu0 %v671
    %v735 = vpop.f32.mrf.mxu0
    %v736 = vadd.f32 %v647, %v735
    %737 = vmatmul.f32.gmra.mxu0 %v674
    %v738 = vpop.f32.mrf.mxu0
    %v739 = vadd.f32 %v647, %v738
    %740 = vmatmul.f32.gmra.mxu0 %v677
    %v741 = vpop.f32.mrf.mxu0
    %v742 = vadd.f32 %v647, %v741
    %743 = vmatmul.f32.gmra.mxu0 %v680
    %v744 = vpop.f32.mrf.mxu0
    %v745 = vadd.f32 %v647, %v744
    %746 = vmatmul.f32.gmra.mxu0 %v683
    %v747 = vpop.f32.mrf.mxu0
    %v748 = vadd.f32 %v647, %v747
    %749 = vmatmul.f32.gmra.mxu0 %v686
    %v750 = vpop.f32.mrf.mxu0
    %v751 = vadd.f32 %v647, %v750
    %752 = vmatmul.f32.gmra.mxu0 %v689
    %v753 = vpop.f32.mrf.mxu0
    %v754 = vadd.f32 %v647, %v753
    %755 = vmatmul.f32.gmra.mxu0 %v692
    %v756 = vpop.f32.mrf.mxu0
    %v757 = vadd.f32 %v647, %v756
    %758 = vmatmul.f32.gmra.mxu0 %v695
    %v759 = vpop.f32.mrf.mxu0
    %v760 = vadd.f32 %v647, %v759
    %761 = vdwg.mxu0
    %v762 = vld [vmem:[%s7] sm:$0x1]
    %v763 = vld [vmem:[%s8] sm:$0x1]
    %vm764 = vcmask 64512
    %v765 = vsel %vm764, %v715, 0.0
    %766 = vadd.xlane.f32.xlu0 %v765
    %v767 = vpop.xlane.xlu0 %766
    %v768 = vsel %vm764, %v718, 0.0
    %769 = vadd.xlane.f32.xlu0 %v768
    %v770 = vpop.xlane.xlu0 %769
    %v771 = vsel %vm764, %v721, 0.0
    %772 = vadd.xlane.f32.xlu0 %v771
    %v773 = vpop.xlane.xlu0 %772
    %v774 = vsel %vm764, %v724, 0.0
    %775 = vadd.xlane.f32.xlu0 %v774
    %v776 = vpop.xlane.xlu0 %775
    %v777 = vsel %vm764, %v727, 0.0
    %778 = vadd.xlane.f32.xlu0 %v777
    %v779 = vpop.xlane.xlu0 %778
    %v780 = vsel %vm764, %v730, 0.0
    %781 = vadd.xlane.f32.xlu0 %v780
    %v782 = vpop.xlane.xlu0 %781
    %v783 = vsel %vm764, %v733, 0.0
    %784 = vadd.xlane.f32.xlu0 %v783
    %v785 = vpop.xlane.xlu0 %784
    %v786 = vsel %vm764, %v736, 0.0
    %787 = vadd.xlane.f32.xlu0 %v786
    %v788 = vpop.xlane.xlu0 %787
    %v789 = vsel %vm764, %v739, 0.0
    %790 = vadd.xlane.f32.xlu0 %v789
    %v791 = vpop.xlane.xlu0 %790
    %v792 = vsel %vm764, %v742, 0.0
    %793 = vadd.xlane.f32.xlu0 %v792
    %v794 = vpop.xlane.xlu0 %793
    %v795 = vsel %vm764, %v745, 0.0
    %796 = vadd.xlane.f32.xlu0 %v795
    %v797 = vpop.xlane.xlu0 %796
    %v798 = vsel %vm764, %v748, 0.0
    %799 = vadd.xlane.f32.xlu0 %v798
    %v800 = vpop.xlane.xlu0 %799
    %v801 = vsel %vm764, %v751, 0.0
    %802 = vadd.xlane.f32.xlu0 %v801
    %v803 = vpop.xlane.xlu0 %802
    %v804 = vsel %vm764, %v754, 0.0
    %805 = vadd.xlane.f32.xlu0 %v804
    %v806 = vpop.xlane.xlu0 %805
    %v807 = vsel %vm764, %v757, 0.0
    %808 = vadd.xlane.f32.xlu0 %v807
    %v809 = vpop.xlane.xlu0 %808
    %v810 = vsel %vm764, %v760, 0.0
    %811 = vadd.xlane.f32.xlu0 %v810
    %v812 = vpop.xlane.xlu0 %811
    %v813 = vrcp.pop 8.0
    %v814 = vmul.f32 8.0, %v813
    %v815 = vsub.f32 1.0, %v814
    %v816 = vmul.f32 %v813, %v815
    %v817 = vadd.f32 %v813, %v816
    %vm818 = vweird.f32 %v813
    %v819 = vsel %vm818, %v813, %v817
    %v820 = vmul.f32 %v767, %v819
    %v821 = vmul.f32 %v770, %v819
    %v822 = vmul.f32 %v773, %v819
    %v823 = vmul.f32 %v776, %v819
    %v824 = vmul.f32 %v779, %v819
    %v825 = vmul.f32 %v782, %v819
    %v826 = vmul.f32 %v785, %v819
    %v827 = vmul.f32 %v788, %v819
    %v828 = vmul.f32 %v791, %v819
    %v829 = vmul.f32 %v794, %v819
    %v830 = vmul.f32 %v797, %v819
    %v831 = vmul.f32 %v800, %v819
    %v832 = vmul.f32 %v803, %v819
    %v833 = vmul.f32 %v806, %v819
    %v834 = vmul.f32 %v809, %v819
    %v835 = vmul.f32 %v812, %v819
    %v836 = vmul.f32 %v715, %v715
    %v837 = vmul.f32 %v718, %v718
    %v838 = vmul.f32 %v721, %v721
    %v839 = vmul.f32 %v724, %v724
    %v840 = vmul.f32 %v727, %v727
    %v841 = vmul.f32 %v730, %v730
    %v842 = vmul.f32 %v733, %v733
    %v843 = vmul.f32 %v736, %v736
    %v844 = vmul.f32 %v739, %v739
    %v845 = vmul.f32 %v742, %v742
    %v846 = vmul.f32 %v745, %v745
    %v847 = vmul.f32 %v748, %v748
    %v848 = vmul.f32 %v751, %v751
    %v849 = vmul.f32 %v754, %v754
    %v850 = vmul.f32 %v757, %v757
    %v851 = vmul.f32 %v760, %v760
    %v852 = vsel %vm764, %v836, 0.0
    %853 = vadd.xlane.f32.xlu0 %v852
    %v854 = vpop.xlane.xlu0 %853
    %v855 = vsel %vm764, %v837, 0.0
    %856 = vadd.xlane.f32.xlu0 %v855
    %v857 = vpop.xlane.xlu0 %856
    %v858 = vsel %vm764, %v838, 0.0
    %859 = vadd.xlane.f32.xlu0 %v858
    %v860 = vpop.xlane.xlu0 %859
    %v861 = vsel %vm764, %v839, 0.0
    %862 = vadd.xlane.f32.xlu0 %v861
    %v863 = vpop.xlane.xlu0 %862
    %v864 = vsel %vm764, %v840, 0.0
    %865 = vadd.xlane.f32.xlu0 %v864
    %v866 = vpop.xlane.xlu0 %865
    %v867 = vsel %vm764, %v841, 0.0
    %868 = vadd.xlane.f32.xlu0 %v867
    %v869 = vpop.xlane.xlu0 %868
    %v870 = vsel %vm764, %v842, 0.0
    %871 = vadd.xlane.f32.xlu0 %v870
    %v872 = vpop.xlane.xlu0 %871
    %v873 = vsel %vm764, %v843, 0.0
    %874 = vadd.xlane.f32.xlu0 %v873
    %v875 = vpop.xlane.xlu0 %874
    %v876 = vsel %vm764, %v844, 0.0
    %877 = vadd.xlane.f32.xlu0 %v876
    %v878 = vpop.xlane.xlu0 %877
    %v879 = vsel %vm764, %v845, 0.0
    %880 = vadd.xlane.f32.xlu0 %v879
    %v881 = vpop.xlane.xlu0 %880
    %v882 = vsel %vm764, %v846, 0.0
    %883 = vadd.xlane.f32.xlu0 %v882
    %v884 = vpop.xlane.xlu0 %883
    %v885 = vsel %vm764, %v847, 0.0
    %886 = vadd.xlane.f32.xlu0 %v885
    %v887 = vpop.xlane.xlu0 %886
    %v888 = vsel %vm764, %v848, 0.0
    %889 = vadd.xlane.f32.xlu0 %v888
    %v890 = vpop.xlane.xlu0 %889
    %v891 = vsel %vm764, %v849, 0.0
    %892 = vadd.xlane.f32.xlu0 %v891
    %v893 = vpop.xlane.xlu0 %892
    %v894 = vsel %vm764, %v850, 0.0
    %895 = vadd.xlane.f32.xlu0 %v894
    %v896 = vpop.xlane.xlu0 %895
    %v897 = vsel %vm764, %v851, 0.0
    %898 = vadd.xlane.f32.xlu0 %v897
    %v899 = vpop.xlane.xlu0 %898
    %v900 = vmul.f32 %v854, %v819
    %v901 = vmul.f32 %v857, %v819
    %v902 = vmul.f32 %v860, %v819
    %v903 = vmul.f32 %v863, %v819
    %v904 = vmul.f32 %v866, %v819
    %v905 = vmul.f32 %v869, %v819
    %v906 = vmul.f32 %v872, %v819
    %v907 = vmul.f32 %v875, %v819
    %v908 = vmul.f32 %v878, %v819
    %v909 = vmul.f32 %v881, %v819
    %v910 = vmul.f32 %v884, %v819
    %v911 = vmul.f32 %v887, %v819
    %v912 = vmul.f32 %v890, %v819
    %v913 = vmul.f32 %v893, %v819
    %v914 = vmul.f32 %v896, %v819
    %v915 = vmul.f32 %v899, %v819
    %v916 = vmul.f32 %v820, %v820
    %v917 = vmul.f32 %v821, %v821
    %v918 = vmul.f32 %v822, %v822
    %v919 = vmul.f32 %v823, %v823
    %v920 = vmul.f32 %v824, %v824
    %v921 = vmul.f32 %v825, %v825
    %v922 = vmul.f32 %v826, %v826
    %v923 = vmul.f32 %v827, %v827
    %v924 = vmul.f32 %v828, %v828
    %v925 = vmul.f32 %v829, %v829
    %v926 = vmul.f32 %v830, %v830
    %v927 = vmul.f32 %v831, %v831
    %v928 = vmul.f32 %v832, %v832
    %v929 = vmul.f32 %v833, %v833
    %v930 = vmul.f32 %v834, %v834
    %v931 = vmul.f32 %v835, %v835
    %v932 = vsub.f32 %v900, %v916
    %v933 = vsub.f32 %v901, %v917
    %v934 = vsub.f32 %v902, %v918
    %v935 = vsub.f32 %v903, %v919
    %v936 = vsub.f32 %v904, %v920
    %v937 = vsub.f32 %v905, %v921
    %v938 = vsub.f32 %v906, %v922
    %v939 = vsub.f32 %v907, %v923
    %v940 = vsub.f32 %v908, %v924
    %v941 = vsub.f32 %v909, %v925
    %v942 = vsub.f32 %v910, %v926
    %v943 = vsub.f32 %v911, %v927
    %v944 = vsub.f32 %v912, %v928
    %v945 = vsub.f32 %v913, %v929
    %v946 = vsub.f32 %v914, %v930
    %v947 = vsub.f32 %v915, %v931
    %v948 = vmax.f32 %v932, 0.0
    %v949 = vmax.f32 %v933, 0.0
    %v950 = vmax.f32 %v934, 0.0
    %v951 = vmax.f32 %v935, 0.0
    %v952 = vmax.f32 %v936, 0.0
    %v953 = vmax.f32 %v937, 0.0
    %v954 = vmax.f32 %v938, 0.0
    %v955 = vmax.f32 %v939, 0.0
    %v956 = vmax.f32 %v940, 0.0
    %v957 = vmax.f32 %v941, 0.0
    %v958 = vmax.f32 %v942, 0.0
    %v959 = vmax.f32 %v943, 0.0
    %v960 = vmax.f32 %v944, 0.0
    %v961 = vmax.f32 %v945, 0.0
    %v962 = vmax.f32 %v946, 0.0
    %v963 = vmax.f32 %v947, 0.0
    %v964 = vsub.f32 %v715, %v820
    %v965 = vsub.f32 %v718, %v821
    %v966 = vsub.f32 %v721, %v822
    %v967 = vsub.f32 %v724, %v823
    %v968 = vsub.f32 %v727, %v824
    %v969 = vsub.f32 %v730, %v825
    %v970 = vsub.f32 %v733, %v826
    %v971 = vsub.f32 %v736, %v827
    %v972 = vsub.f32 %v739, %v828
    %v973 = vsub.f32 %v742, %v829
    %v974 = vsub.f32 %v745, %v830
    %v975 = vsub.f32 %v748, %v831
    %v976 = vsub.f32 %v751, %v832
    %v977 = vsub.f32 %v754, %v833
    %v978 = vsub.f32 %v757, %v834
    %v979 = vsub.f32 %v760, %v835
    %v980 = vadd.f32 %v948, 1e-05
    %v981 = vadd.f32 %v949, 1e-05
    %v982 = vadd.f32 %v950, 1e-05
    %v983 = vadd.f32 %v951, 1e-05
    %v984 = vadd.f32 %v952, 1e-05
    %v985 = vadd.f32 %v953, 1e-05
    %v986 = vadd.f32 %v954, 1e-05
    %v987 = vadd.f32 %v955, 1e-05
    %v988 = vadd.f32 %v956, 1e-05
    %v989 = vadd.f32 %v957, 1e-05
    %v990 = vadd.f32 %v958, 1e-05
    %v991 = vadd.f32 %v959, 1e-05
    %v992 = vadd.f32 %v960, 1e-05
    %v993 = vadd.f32 %v961, 1e-05
    %v994 = vadd.f32 %v962, 1e-05
    %v995 = vadd.f32 %v963, 1e-05
    %v996 = vrsqrt.pop %v980
    %v997 = vmul.f32 %v996, %v980
    %v998 = vmul.f32 %v997, %v996
    %v999 = vmul.f32 0.5, %v998
    %v1000 = vsub.f32 1.5, %v999
    %v1001 = vmul.f32 %v996, %v1000
    %vm1002 = vweird.f32 %v980
    %vm1003 = vweird.f32 %v996
    %vm1004 = vmor %vm1002, %vm1003
    %v1005 = vsel %vm1004, %v996, %v1001
    %v1006 = vrsqrt.pop %v981
    %v1007 = vmul.f32 %v1006, %v981
    %v1008 = vmul.f32 %v1007, %v1006
    %v1009 = vmul.f32 0.5, %v1008
    %v1010 = vsub.f32 1.5, %v1009
    %v1011 = vmul.f32 %v1006, %v1010
    %vm1012 = vweird.f32 %v981
    %vm1013 = vweird.f32 %v1006
    %vm1014 = vmor %vm1012, %vm1013
    %v1015 = vsel %vm1014, %v1006, %v1011
    %v1016 = vrsqrt.pop %v982
    %v1017 = vmul.f32 %v1016, %v982
    %v1018 = vmul.f32 %v1017, %v1016
    %v1019 = vmul.f32 0.5, %v1018
    %v1020 = vsub.f32 1.5, %v1019
    %v1021 = vmul.f32 %v1016, %v1020
    %vm1022 = vweird.f32 %v982
    %vm1023 = vweird.f32 %v1016
    %vm1024 = vmor %vm1022, %vm1023
    %v1025 = vsel %vm1024, %v1016, %v1021
    %v1026 = vrsqrt.pop %v983
    %v1027 = vmul.f32 %v1026, %v983
    %v1028 = vmul.f32 %v1027, %v1026
    %v1029 = vmul.f32 0.5, %v1028
    %v1030 = vsub.f32 1.5, %v1029
    %v1031 = vmul.f32 %v1026, %v1030
    %vm1032 = vweird.f32 %v983
    %vm1033 = vweird.f32 %v1026
    %vm1034 = vmor %vm1032, %vm1033
    %v1035 = vsel %vm1034, %v1026, %v1031
    %v1036 = vrsqrt.pop %v984
    %v1037 = vmul.f32 %v1036, %v984
    %v1038 = vmul.f32 %v1037, %v1036
    %v1039 = vmul.f32 0.5, %v1038
    %v1040 = vsub.f32 1.5, %v1039
    %v1041 = vmul.f32 %v1036, %v1040
    %vm1042 = vweird.f32 %v984
    %vm1043 = vweird.f32 %v1036
    %vm1044 = vmor %vm1042, %vm1043
    %v1045 = vsel %vm1044, %v1036, %v1041
    %v1046 = vrsqrt.pop %v985
    %v1047 = vmul.f32 %v1046, %v985
    %v1048 = vmul.f32 %v1047, %v1046
    %v1049 = vmul.f32 0.5, %v1048
    %v1050 = vsub.f32 1.5, %v1049
    %v1051 = vmul.f32 %v1046, %v1050
    %vm1052 = vweird.f32 %v985
    %vm1053 = vweird.f32 %v1046
    %vm1054 = vmor %vm1052, %vm1053
    %v1055 = vsel %vm1054, %v1046, %v1051
    %v1056 = vrsqrt.pop %v986
    %v1057 = vmul.f32 %v1056, %v986
    %v1058 = vmul.f32 %v1057, %v1056
    %v1059 = vmul.f32 0.5, %v1058
    %v1060 = vsub.f32 1.5, %v1059
    %v1061 = vmul.f32 %v1056, %v1060
    %vm1062 = vweird.f32 %v986
    %vm1063 = vweird.f32 %v1056
    %vm1064 = vmor %vm1062, %vm1063
    %v1065 = vsel %vm1064, %v1056, %v1061
    %v1066 = vrsqrt.pop %v987
    %v1067 = vmul.f32 %v1066, %v987
    %v1068 = vmul.f32 %v1067, %v1066
    %v1069 = vmul.f32 0.5, %v1068
    %v1070 = vsub.f32 1.5, %v1069
    %v1071 = vmul.f32 %v1066, %v1070
    %vm1072 = vweird.f32 %v987
    %vm1073 = vweird.f32 %v1066
    %vm1074 = vmor %vm1072, %vm1073
    %v1075 = vsel %vm1074, %v1066, %v1071
    %v1076 = vrsqrt.pop %v988
    %v1077 = vmul.f32 %v1076, %v988
    %v1078 = vmul.f32 %v1077, %v1076
    %v1079 = vmul.f32 0.5, %v1078
    %v1080 = vsub.f32 1.5, %v1079
    %v1081 = vmul.f32 %v1076, %v1080
    %vm1082 = vweird.f32 %v988
    %vm1083 = vweird.f32 %v1076
    %vm1084 = vmor %vm1082, %vm1083
    %v1085 = vsel %vm1084, %v1076, %v1081
    %v1086 = vrsqrt.pop %v989
    %v1087 = vmul.f32 %v1086, %v989
    %v1088 = vmul.f32 %v1087, %v1086
    %v1089 = vmul.f32 0.5, %v1088
    %v1090 = vsub.f32 1.5, %v1089
    %v1091 = vmul.f32 %v1086, %v1090
    %vm1092 = vweird.f32 %v989
    %vm1093 = vweird.f32 %v1086
    %vm1094 = vmor %vm1092, %vm1093
    %v1095 = vsel %vm1094, %v1086, %v1091
    %v1096 = vrsqrt.pop %v990
    %v1097 = vmul.f32 %v1096, %v990
    %v1098 = vmul.f32 %v1097, %v1096
    %v1099 = vmul.f32 0.5, %v1098
    %v1100 = vsub.f32 1.5, %v1099
    %v1101 = vmul.f32 %v1096, %v1100
    %vm1102 = vweird.f32 %v990
    %vm1103 = vweird.f32 %v1096
    %vm1104 = vmor %vm1102, %vm1103
    %v1105 = vsel %vm1104, %v1096, %v1101
    %v1106 = vrsqrt.pop %v991
    %v1107 = vmul.f32 %v1106, %v991
    %v1108 = vmul.f32 %v1107, %v1106
    %v1109 = vmul.f32 0.5, %v1108
    %v1110 = vsub.f32 1.5, %v1109
    %v1111 = vmul.f32 %v1106, %v1110
    %vm1112 = vweird.f32 %v991
    %vm1113 = vweird.f32 %v1106
    %vm1114 = vmor %vm1112, %vm1113
    %v1115 = vsel %vm1114, %v1106, %v1111
    %v1116 = vrsqrt.pop %v992
    %v1117 = vmul.f32 %v1116, %v992
    %v1118 = vmul.f32 %v1117, %v1116
    %v1119 = vmul.f32 0.5, %v1118
    %v1120 = vsub.f32 1.5, %v1119
    %v1121 = vmul.f32 %v1116, %v1120
    %vm1122 = vweird.f32 %v992
    %vm1123 = vweird.f32 %v1116
    %vm1124 = vmor %vm1122, %vm1123
    %v1125 = vsel %vm1124, %v1116, %v1121
    %v1126 = vrsqrt.pop %v993
    %v1127 = vmul.f32 %v1126, %v993
    %v1128 = vmul.f32 %v1127, %v1126
    %v1129 = vmul.f32 0.5, %v1128
    %v1130 = vsub.f32 1.5, %v1129
    %v1131 = vmul.f32 %v1126, %v1130
    %vm1132 = vweird.f32 %v993
    %vm1133 = vweird.f32 %v1126
    %vm1134 = vmor %vm1132, %vm1133
    %v1135 = vsel %vm1134, %v1126, %v1131
    %v1136 = vrsqrt.pop %v994
    %v1137 = vmul.f32 %v1136, %v994
    %v1138 = vmul.f32 %v1137, %v1136
    %v1139 = vmul.f32 0.5, %v1138
    %v1140 = vsub.f32 1.5, %v1139
    %v1141 = vmul.f32 %v1136, %v1140
    %vm1142 = vweird.f32 %v994
    %vm1143 = vweird.f32 %v1136
    %vm1144 = vmor %vm1142, %vm1143
    %v1145 = vsel %vm1144, %v1136, %v1141
    %v1146 = vrsqrt.pop %v995
    %v1147 = vmul.f32 %v1146, %v995
    %v1148 = vmul.f32 %v1147, %v1146
    %v1149 = vmul.f32 0.5, %v1148
    %v1150 = vsub.f32 1.5, %v1149
    %v1151 = vmul.f32 %v1146, %v1150
    %vm1152 = vweird.f32 %v995
    %vm1153 = vweird.f32 %v1146
    %vm1154 = vmor %vm1152, %vm1153
    %v1155 = vsel %vm1154, %v1146, %v1151
    %v1156 = vmul.f32 %v964, %v1005
    %v1157 = vmul.f32 %v965, %v1015
    %v1158 = vmul.f32 %v966, %v1025
    %v1159 = vmul.f32 %v967, %v1035
    %v1160 = vmul.f32 %v968, %v1045
    %v1161 = vmul.f32 %v969, %v1055
    %v1162 = vmul.f32 %v970, %v1065
    %v1163 = vmul.f32 %v971, %v1075
    %v1164 = vmul.f32 %v972, %v1085
    %v1165 = vmul.f32 %v973, %v1095
    %v1166 = vmul.f32 %v974, %v1105
    %v1167 = vmul.f32 %v975, %v1115
    %v1168 = vmul.f32 %v976, %v1125
    %v1169 = vmul.f32 %v977, %v1135
    %v1170 = vmul.f32 %v978, %v1145
    %v1171 = vmul.f32 %v979, %v1155
    %v1173 = vperm.slane %v762, 0
    %v1175 = vmul.f32 %v1156, %v1173
    %v1176 = vmul.f32 %v1157, %v1173
    %v1177 = vmul.f32 %v1158, %v1173
    %v1178 = vmul.f32 %v1159, %v1173
    %v1179 = vmul.f32 %v1160, %v1173
    %v1180 = vmul.f32 %v1161, %v1173
    %v1181 = vmul.f32 %v1162, %v1173
    %v1182 = vmul.f32 %v1163, %v1173
    %v1183 = vmul.f32 %v1164, %v1173
    %v1184 = vmul.f32 %v1165, %v1173
    %v1185 = vmul.f32 %v1166, %v1173
    %v1186 = vmul.f32 %v1167, %v1173
    %v1187 = vmul.f32 %v1168, %v1173
    %v1188 = vmul.f32 %v1169, %v1173
    %v1189 = vmul.f32 %v1170, %v1173
    %v1190 = vmul.f32 %v1171, %v1173
    %v1192 = vperm.slane %v763, 0
    %v1194 = vadd.f32 %v1175, %v1192
    %v1195 = vadd.f32 %v1176, %v1192
    %v1196 = vadd.f32 %v1177, %v1192
    %v1197 = vadd.f32 %v1178, %v1192
    %v1198 = vadd.f32 %v1179, %v1192
    %v1199 = vadd.f32 %v1180, %v1192
    %v1200 = vadd.f32 %v1181, %v1192
    %v1201 = vadd.f32 %v1182, %v1192
    %v1202 = vadd.f32 %v1183, %v1192
    %v1203 = vadd.f32 %v1184, %v1192
    %v1204 = vadd.f32 %v1185, %v1192
    %v1205 = vadd.f32 %v1186, %v1192
    %v1206 = vadd.f32 %v1187, %v1192
    %v1207 = vadd.f32 %v1188, %v1192
    %v1208 = vadd.f32 %v1189, %v1192
    %v1209 = vadd.f32 %v1190, %v1192
    %v1210 = vmax.f32 %v1194, 0.0
    %v1211 = vmax.f32 %v1195, 0.0
    %v1212 = vmax.f32 %v1196, 0.0
    %v1213 = vmax.f32 %v1197, 0.0
    %v1214 = vmax.f32 %v1198, 0.0
    %v1215 = vmax.f32 %v1199, 0.0
    %v1216 = vmax.f32 %v1200, 0.0
    %v1217 = vmax.f32 %v1201, 0.0
    %v1218 = vmax.f32 %v1202, 0.0
    %v1219 = vmax.f32 %v1203, 0.0
    %v1220 = vmax.f32 %v1204, 0.0
    %v1221 = vmax.f32 %v1205, 0.0
    %v1222 = vmax.f32 %v1206, 0.0
    %v1223 = vmax.f32 %v1207, 0.0
    %v1224 = vmax.f32 %v1208, 0.0
    %v1225 = vmax.f32 %v1209, 0.0
    %v1226 = vld [vmem:[%s9] sm:$0xff]
    %v1228 = vsel %vm764, %v1226, 0
    %v1231 = vsel %vm764, %v1210, 0
    %v1234 = vsel %vm764, %v1211, 0
    %v1237 = vsel %vm764, %v1212, 0
    %v1240 = vsel %vm764, %v1213, 0
    %v1243 = vsel %vm764, %v1214, 0
    %v1246 = vsel %vm764, %v1215, 0
    %v1249 = vsel %vm764, %v1216, 0
    %v1252 = vsel %vm764, %v1217, 0
    %v1255 = vsel %vm764, %v1218, 0
    %v1258 = vsel %vm764, %v1219, 0
    %v1261 = vsel %vm764, %v1220, 0
    %v1264 = vsel %vm764, %v1221, 0
    %v1267 = vsel %vm764, %v1222, 0
    %v1270 = vsel %vm764, %v1223, 0
    %v1273 = vsel %vm764, %v1224, 0
    %v1276 = vsel %vm764, %v1225, 0
    %1278 = vmatpush.xpose.msra.mxu0 %v1276
    %1279 = vmatpush.xpose.msra.mxu0 %v1273
    %1280 = vmatpush.xpose.msra.mxu0 %v1270
    %1281 = vmatpush.xpose.msra.mxu0 %v1267
    %1282 = vmatpush.xpose.msra.mxu0 %v1264
    %1283 = vmatpush.xpose.msra.mxu0 %v1261
    %1284 = vmatpush.xpose.msra.mxu0 %v1258
    %1285 = vmatpush.xpose.msra.mxu0 %v1255
    %1286 = vmatpush.xpose.msra.mxu0 %v1252
    %1287 = vmatpush.xpose.msra.mxu0 %v1249
    %1288 = vmatpush.xpose.msra.mxu0 %v1246
    %1289 = vmatpush.xpose.msra.mxu0 %v1243
    %1290 = vmatpush.xpose.msra.mxu0 %v1240
    %1291 = vmatpush.xpose.msra.mxu0 %v1237
    %1292 = vmatpush.xpose.msra.mxu0 %v1234
    %1293 = vmatpush.xpose.msra.mxu0 %v1231
    %1294 = vmatmul.f32.gmra.mxu0 %v1228
    %v1295 = vpop.f32.mrf.mxu0
    %v1296 = vadd.f32 0.0, %v1295
    %1297 = vdwg.mxu0
    %v1298 = vld [vmem:[#allocation2] sm:$0x1]
    %1300 = vset.pattern.permute.xlu0 0
    %1301 = vperm.xlu0 %1300, %v1298
    %v1302 = vpop.permute.xlu0 %1301
    %v1304 = vperm.slane %v1302, 0
    %v1305 = vadd.f32 %v1296, %v1304
    %v1306 = vsub.f32 0.0, %v1305
    %v1307 = vmul.f32 %v1306, 1.442695
    %v1308 = vpow.pop %v1307
    %v1309 = vadd.f32 %v1308, 1.0
    %v1310 = vrcp.pop %v1309
    %v1311 = vmul.f32 %v1309, %v1310
    %v1312 = vsub.f32 1.0, %v1311
    %v1313 = vmul.f32 %v1310, %v1312
    %v1314 = vadd.f32 %v1310, %v1313
    %vm1315 = vweird.f32 %v1309
    %vm1316 = vweird.f32 %v1310
    %vm1317 = vmor %vm1315, %vm1316
    %v1318 = vsel %vm1317, %v1310, %v1314
    %v1319 = vand.u32 2147483647, %v1309
    %vm1320 = vcmp.eq.f32.partialorder %v1319, 8.507059e+37
    %v1321 = vand.u32 %v1309, 2147483648
    %v1322 = vor.u32 1.1754944e-38, %v1321
    %v1323 = vsel %vm1320, %v1322, %v1318
    %v1324 = vmul.f32 1.0, %v1323
    %1325 = vst [vmem:[#allocation3] sm:$0x1] %v1324
    // Predicated region
    $region46: #{tpu_custom_call.1} parent=1 // pred_check
      _
    $region47: #{tpu_custom_call.1} parent=1 // pred_check_branch
      %1327 = sbr.rel (0) target = $region49
    $region48: #{tpu_custom_call.1} parent=1 // pred_region
      %1329 = vsyncadd [#allocation4], 0
      %s1331 = sshll.u32 [#allocation3], 4
      %s1332 = int_to_ptr.vmem [resolvable:$true] %s1331
      %s1333 = sshll.u32 %s11, 4
      %s1334 = int_to_ptr.hbm [resolvable:$true] %s1333
      %1336 = dma.vmem_to_hbm [thread:$0]  %s1332, 16, %s1334, [#allocation4]
    $region49: #{tpu_custom_call.1} parent=1 // pred_fallthru
      _
    // Predicated region
    $region50: #{tpu_custom_call.1} parent=1 // pred_check
      _
    $region51: #{tpu_custom_call.1} parent=1 // pred_check_branch
      %1338 = sbr.rel (0) target = $region53
    $region52: #{tpu_custom_call.1} parent=1 // pred_region
      %1340 = dma.done [#allocation4], 16
    $region53: #{tpu_custom_call.1} parent=1 // pred_fallthru
      _
    %1341 = vsyncpa [#allocation4], 1

</llo_original>
